<compile_context>
chip_gen: v5e
topology: v5e:2x2
jax: 0.10.0
libtpu: 0.0.40
codegen_flags: <defaults>
</compile_context>

<pallas_src>
import jax
import jax.numpy as jnp
from jax import lax
from jax.experimental import pallas as pl
from jax.experimental.pallas import tpu as pltpu


def _wrapper_forward_kernel(x_ref, w1_ref, b1_ref, w2_ref, b2_ref, o_ref):
    # feature_extractor: Linear + ReLU.  Weights are torch-layout (out, in);
    # contract x's last dim with w's last dim so no transposed weight copy is
    # ever materialized (MXU handles the transposed RHS directly).
    h = lax.dot_general(
        x_ref[...], w1_ref[...],
        dimension_numbers=(((1,), (1,)), ((), ())),
        preferred_element_type=jnp.float32)
    h = jnp.maximum(h + b1_ref[...], 0.0)
    # flatten_features -> .to(float32): h is already f32 (B_pad, HIDDEN)
    # classifier head: Linear (output lane-padded to 128)
    logits = lax.dot_general(
        h, w2_ref[...],
        dimension_numbers=(((1,), (1,)), ((), ())),
        preferred_element_type=jnp.float32)
    o_ref[...] = logits + b2_ref[...]


def prepare_params(w1_torch, b1, w2_torch, b2):
    """One-time parameter preparation (outside the per-call forward):
    keep torch (out, in) layout (no transpose), pad classifier dim to a
    lane-dense multiple of 128, reshape biases to 2-D rows."""
    H, D = w1_torch.shape
    C = w2_torch.shape[0]
    C_pad = max(128, pl.cdiv(C, 128) * 128)

    w1 = w1_torch.astype(jnp.float32)                           # (H, D) torch layout
    b1r = b1.reshape(1, H).astype(jnp.float32)                  # (1, H)
    w2_pad = jnp.zeros((C_pad, H), jnp.float32).at[:C].set(
        w2_torch.astype(jnp.float32))                           # (C_pad, H) torch layout
    b2_pad = jnp.zeros((1, C_pad), jnp.float32).at[0, :C].set(
        b2.astype(jnp.float32))                                 # (1, C_pad)
    return dict(w1=w1, b1=b1r, w2=w2_pad, b2=b2_pad, num_classes=C)


def torch_module_wrapper_forward(x_nchw, params):
    """Forward pass of TorchModuleWrapper (synthetic MLP feature_extractor +
    Linear classifier); the whole hot path is one Pallas kernel."""
    B = x_nchw.shape[0]
    # flatten_image: out = out.flatten(1)   (glue, plain JAX, row-major == torch)
    x2d = x_nchw.reshape(B, -1).astype(jnp.float32)
    D = x2d.shape[1]
    C = params["num_classes"]
    C_pad = params["w2"].shape[0]

    # sublane-pad the batch to the native f32 tile (8 rows)
    B_pad = pl.cdiv(B, 8) * 8
    x_pad = jnp.zeros((B_pad, D), jnp.float32).at[:B].set(x2d)

    out_pad = pl.pallas_call(
        _wrapper_forward_kernel,
        out_shape=jax.ShapeDtypeStruct((B_pad, C_pad), jnp.float32),
        # no grid: single full-array VMEM blocks (tiny problem, no pipelining)
        in_specs=[pl.BlockSpec(memory_space=pltpu.MemorySpace.VMEM)] * 5,
        out_specs=pl.BlockSpec(memory_space=pltpu.MemorySpace.VMEM),
    )(x_pad, params["w1"], params["b1"], params["w2"], params["b2"])

    out = out_pad[:B, :C]
    # return out.squeeze()   (glue; matches torch semantics incl. B==1 case)
    return jnp.squeeze(out)


if __name__ == "__main__":
    # small shapes consistent with the module's forward
    B, Cin, Hs, Ws = 2, 4, 16, 16
    D = Cin * Hs * Ws          # 1024 flattened image features
    HIDDEN = 128               # feature_extractor output dim
    NUM_CLASSES = 10           # classifier output dim

    key = jax.random.PRNGKey(0)
    kx, kw1, kb1, kw2, kb2 = jax.random.split(key, 5)

    x = jax.random.normal(kx, (B, Cin, Hs, Ws), dtype=jnp.float32)
    # deterministic parameter init (torch Linear weight shape: (out, in))
    w1_torch = jax.random.normal(kw1, (HIDDEN, D), dtype=jnp.float32) * 0.02
    b1 = jax.random.normal(kb1, (HIDDEN,), dtype=jnp.float32) * 0.02
    w2_torch = jax.random.normal(kw2, (NUM_CLASSES, HIDDEN), dtype=jnp.float32) * 0.02
    b2 = jax.random.normal(kb2, (NUM_CLASSES,), dtype=jnp.float32) * 0.02

    # one-time parameter setup (padding, no transposes)
    params = prepare_params(w1_torch, b1, w2_torch, b2)

    out = torch_module_wrapper_forward(x, params)
    out = jax.block_until_ready(out)

    # pure-JAX reference check of the same forward semantics
    ref = jnp.maximum(x.reshape(B, -1) @ w1_torch.T + b1, 0.0) @ w2_torch.T + b2
    ref = jnp.squeeze(ref)
    assert out.shape == ref.shape == (B, NUM_CLASSES)
    assert jnp.allclose(out, ref, atol=1e-4, rtol=1e-4)

    # TODO(synk): training-time machinery (optimizers, freezing, BN-eval,
    # checkpointing, classifier expansion) has no forward-pass / Pallas
    # equivalent and is intentionally omitted.
    print("KERNEL_OK")
</pallas_src>

<mosaic_0001>
module attributes {stable_mosaic.version = 11 : i64} {
  func.func @_wrapper_forward_kernel(%arg0: memref<8x1024xf32, #tpu.memory_space<vmem>>, %arg1: memref<128x1024xf32, #tpu.memory_space<vmem>>, %arg2: memref<1x128xf32, #tpu.memory_space<vmem>>, %arg3: memref<128x128xf32, #tpu.memory_space<vmem>>, %arg4: memref<1x128xf32, #tpu.memory_space<vmem>>, %arg5: memref<8x128xf32, #tpu.memory_space<vmem>>) attributes {dimension_semantics = [], scalar_prefetch = 0 : i64, scratch_operands = 0 : i64, tpu.core_type = #tpu.core_type<tc>} {
    %c0 = arith.constant 0 : index
    %c0_0 = arith.constant 0 : index
    %0 = vector.load %arg0[%c0, %c0_0] : memref<8x1024xf32, #tpu.memory_space<vmem>>, vector<8x1024xf32>
    %c0_1 = arith.constant 0 : index
    %c0_2 = arith.constant 0 : index
    %1 = vector.load %arg1[%c0_1, %c0_2] : memref<128x1024xf32, #tpu.memory_space<vmem>>, vector<128x1024xf32>
    %cst = arith.constant dense<0.000000e+00> : vector<8x128xf32>
    %2 = tpu.matmul %0, %1, %cst {dimension_numbers = #tpu.dot_dimension_numbers<[1], [1], [0], [0], [0, 0, 1, 0], [], []>} : vector<8x1024xf32>, vector<128x1024xf32>, vector<8x128xf32> -> vector<8x128xf32>
    %c0_3 = arith.constant 0 : index
    %c0_4 = arith.constant 0 : index
    %3 = vector.load %arg2[%c0_3, %c0_4] : memref<1x128xf32, #tpu.memory_space<vmem>>, vector<1x128xf32>
    %4 = vector.broadcast %3 : vector<1x128xf32> to vector<8x128xf32>
    %5 = arith.addf %2, %4 : vector<8x128xf32>
    %cst_5 = arith.constant 0.000000e+00 : f32
    %6 = vector.broadcast %cst_5 : f32 to vector<8x128xf32>
    %7 = arith.maximumf %5, %6 : vector<8x128xf32>
    %c0_6 = arith.constant 0 : index
    %c0_7 = arith.constant 0 : index
    %8 = vector.load %arg3[%c0_6, %c0_7] : memref<128x128xf32, #tpu.memory_space<vmem>>, vector<128x128xf32>
    %cst_8 = arith.constant dense<0.000000e+00> : vector<8x128xf32>
    %9 = tpu.matmul %7, %8, %cst_8 {dimension_numbers = #tpu.dot_dimension_numbers<[1], [1], [0], [0], [0, 0, 1, 0], [], []>} : vector<8x128xf32>, vector<128x128xf32>, vector<8x128xf32> -> vector<8x128xf32>
    %c0_9 = arith.constant 0 : index
    %c0_10 = arith.constant 0 : index
    %10 = vector.load %arg4[%c0_9, %c0_10] : memref<1x128xf32, #tpu.memory_space<vmem>>, vector<1x128xf32>
    %11 = vector.broadcast %10 : vector<1x128xf32> to vector<8x128xf32>
    %12 = arith.addf %9, %11 : vector<8x128xf32>
    %c0_11 = arith.constant 0 : index
    %c0_12 = arith.constant 0 : index
    %13 = vector.load %arg5[%c0_11, %c0_12] : memref<8x128xf32, #tpu.memory_space<vmem>>, vector<8x128xf32>
    tpu.vector_store %arg5[%c0_11, %c0_12], %12 {strides = array<i32>} : memref<8x128xf32, #tpu.memory_space<vmem>>, vector<8x128xf32>,
    return
  }
}

</mosaic_0001>

<llo_original>
// kernel: tpu_custom_call.1
$region0: #{tpu_custom_call.1}
  #allocation0 [shape = 'u32[]', space=smem, size = 0x4, offset = 0x4, fixed_abs, tag = 'smem constant byte address 0x4 - core index']
  #allocation1 [shape = 'u32[72,128]{1,0:T(1,128)}', space=vmem, size = 0x9000, scoped, tag = 'internal scratch']
  %s0 = inlined_call_operand.hbm [shape: f32[8,1024], index: 0, kind: input, shape index: {}]
  %s1 = inlined_call_operand.hbm [shape: f32[128,1024], index: 1, kind: input, shape index: {}]
  %s2 = inlined_call_operand.vmem [shape: f32[1,128], index: 2, kind: input, shape index: {}]
  %s3 = inlined_call_operand.hbm [shape: f32[128,128], index: 3, kind: input, shape index: {}]
  %s4 = inlined_call_operand.vmem [shape: f32[1,128], index: 4, kind: input, shape index: {}]
  %s5 = inlined_call_operand.hbm [shape: f32[8,128], index: 5, kind: output, shape index: {}]
  %s6 = sld [smem:[#allocation0]]
  $region42: #{tpu_custom_call.1} parent=0
    _
  %s8 = ssub.s32 1, %s6
  %s9 = scalar_select 0, %s8, %s6
  $region1: #{tpu_custom_call.1} parent=0
    #allocation2 [shape = 'u8[32768]{0}', space=vmem, size = 0x8000, scoped, tag = 'input window, operand 0, single buffered']
    #allocation3 [shape = 's32[1]{0}', space=sflag, size = 0x4, scoped, tag = 'scoped memory for tpu_custom_call.1']
    #allocation4 [shape = 's32[1]{0}', space=sflag, size = 0x4, scoped, tag = 'scoped memory for tpu_custom_call.1']
    #allocation5 [shape = 'u8[524288]{0}', space=vmem, size = 0x80000, scoped, tag = 'input window, operand 1, single buffered']
    #allocation6 [shape = 's32[1]{0}', space=sflag, size = 0x4, scoped, tag = 'scoped memory for tpu_custom_call.1']
    #allocation7 [shape = 'u8[65536]{0}', space=vmem, size = 0x10000, scoped, tag = 'input window, operand 3, single buffered']
    #allocation8 [shape = 'u8[4096]{0}', space=vmem, size = 0x1000, scoped, tag = 'output window, operand 0, single buffered']
    %10 = vsyncpa [#allocation3], 0
    %11 = vsyncpa [#allocation6], 0
    %12 = vsyncpa [#allocation4], 0
    // Predicated region
    $region2: #{tpu_custom_call.1} parent=1 // pred_check
      _
    $region3: #{tpu_custom_call.1} parent=1 // pred_check_branch
      %14 = sbr.rel (0) target = $region5
    $region4: #{tpu_custom_call.1} parent=1 // pred_region
      %16 = vsyncadd [#allocation3], 0
      %s18 = sshll.u32 %s0, 4
      %s19 = int_to_ptr.hbm [resolvable:$true] %s18
      %s20 = sshll.u32 [#allocation2], 4
      %s21 = int_to_ptr.vmem [resolvable:$true] %s20
      %23 = dma.hbm_to_vmem [thread:$0]  %s19, 1024, %s21, [#allocation3]
    $region5: #{tpu_custom_call.1} parent=1 // pred_fallthru
      _
    // Predicated region
    $region6: #{tpu_custom_call.1} parent=1 // pred_check
      _
    $region7: #{tpu_custom_call.1} parent=1 // pred_check_branch
      %25 = sbr.rel (0) target = $region9
    $region8: #{tpu_custom_call.1} parent=1 // pred_region
      %27 = vsyncadd [#allocation6], 0
      %s28 = sshll.u32 %s1, 4
      %s29 = int_to_ptr.hbm [resolvable:$true] %s28
      %s30 = sshll.u32 [#allocation5], 4
      %s31 = int_to_ptr.vmem [resolvable:$true] %s30
      %36 = dma.hbm_to_vmem [thread:$0]  %s29, 16384, %s31, [#allocation6], 1024, 1024, 64
    $region9: #{tpu_custom_call.1} parent=1 // pred_fallthru
      _
    // Predicated region
    $region10: #{tpu_custom_call.1} parent=1 // pred_check
      _
    $region11: #{tpu_custom_call.1} parent=1 // pred_check_branch
      %38 = sbr.rel (0) target = $region13
    $region12: #{tpu_custom_call.1} parent=1 // pred_region
      _
    $region13: #{tpu_custom_call.1} parent=1 // pred_fallthru
      _
    // Predicated region
    $region14: #{tpu_custom_call.1} parent=1 // pred_check
      _
    $region15: #{tpu_custom_call.1} parent=1 // pred_check_branch
      %40 = sbr.rel (0) target = $region17
    $region16: #{tpu_custom_call.1} parent=1 // pred_region
      %42 = vsyncadd [#allocation6], 0
      %s43 = sshll.u32 %s3, 4
      %s44 = int_to_ptr.hbm [resolvable:$true] %s43
      %s45 = sshll.u32 [#allocation7], 4
      %s46 = int_to_ptr.vmem [resolvable:$true] %s45
      %51 = dma.hbm_to_vmem [thread:$0]  %s44, 2048, %s46, [#allocation6], 128, 128, 8
    $region17: #{tpu_custom_call.1} parent=1 // pred_fallthru
      _
    // Predicated region
    $region18: #{tpu_custom_call.1} parent=1 // pred_check
      _
    $region19: #{tpu_custom_call.1} parent=1 // pred_check_branch
      %53 = sbr.rel (0) target = $region21
    $region20: #{tpu_custom_call.1} parent=1 // pred_region
      _
    $region21: #{tpu_custom_call.1} parent=1 // pred_fallthru
      _
    // Predicated region
    $region22: #{tpu_custom_call.1} parent=1 // pred_check
      _
    $region23: #{tpu_custom_call.1} parent=1 // pred_check_branch
      %55 = sbr.rel (0) target = $region25
    $region24: #{tpu_custom_call.1} parent=1 // pred_region
      %57 = dma.done [#allocation3], 1024
    $region25: #{tpu_custom_call.1} parent=1 // pred_fallthru
      _
    // Predicated region
    $region26: #{tpu_custom_call.1} parent=1 // pred_check
      _
    $region27: #{tpu_custom_call.1} parent=1 // pred_check_branch
      %59 = sbr.rel (0) target = $region29
    $region28: #{tpu_custom_call.1} parent=1 // pred_region
      %61 = dma.done [#allocation6], 16384
    $region29: #{tpu_custom_call.1} parent=1 // pred_fallthru
      _
    // Predicated region
    $region30: #{tpu_custom_call.1} parent=1 // pred_check
      _
    $region31: #{tpu_custom_call.1} parent=1 // pred_check_branch
      %63 = sbr.rel (0) target = $region33
    $region32: #{tpu_custom_call.1} parent=1 // pred_region
      %65 = dma.done [#allocation6], 2048
    $region33: #{tpu_custom_call.1} parent=1 // pred_fallthru
      _
    %v66 = vld [vmem:[#allocation2] sm:$0xff]
    %v67 = vld [vmem:[#allocation2 + $0x8] sm:$0xff]
    %v68 = vld [vmem:[#allocation2 + $0x10] sm:$0xff]
    %v69 = vld [vmem:[#allocation2 + $0x18] sm:$0xff]
    %v70 = vld [vmem:[#allocation2 + $0x20] sm:$0xff]
    %v71 = vld [vmem:[#allocation2 + $0x28] sm:$0xff]
    %v72 = vld [vmem:[#allocation2 + $0x30] sm:$0xff]
    %v73 = vld [vmem:[#allocation2 + $0x38] sm:$0xff]
    %v74 = vld [vmem:[#allocation5] sm:$0xff]
    %v75 = vld [vmem:[#allocation5 + $0x8] sm:$0xff]
    %v76 = vld [vmem:[#allocation5 + $0x10] sm:$0xff]
    %v77 = vld [vmem:[#allocation5 + $0x18] sm:$0xff]
    %v78 = vld [vmem:[#allocation5 + $0x20] sm:$0xff]
    %v79 = vld [vmem:[#allocation5 + $0x28] sm:$0xff]
    %v80 = vld [vmem:[#allocation5 + $0x30] sm:$0xff]
    %v81 = vld [vmem:[#allocation5 + $0x38] sm:$0xff]
    %v82 = vld [vmem:[#allocation5 + $0x40] sm:$0xff]
    %v83 = vld [vmem:[#allocation5 + $0x48] sm:$0xff]
    %v84 = vld [vmem:[#allocation5 + $0x50] sm:$0xff]
    %v85 = vld [vmem:[#allocation5 + $0x58] sm:$0xff]
    %v86 = vld [vmem:[#allocation5 + $0x60] sm:$0xff]
    %v87 = vld [vmem:[#allocation5 + $0x68] sm:$0xff]
    %v88 = vld [vmem:[#allocation5 + $0x70] sm:$0xff]
    %v89 = vld [vmem:[#allocation5 + $0x78] sm:$0xff]
    %v90 = vld [vmem:[#allocation5 + $0x80] sm:$0xff]
    %v91 = vld [vmem:[#allocation5 + $0x88] sm:$0xff]
    %v92 = vld [vmem:[#allocation5 + $0x90] sm:$0xff]
    %v93 = vld [vmem:[#allocation5 + $0x98] sm:$0xff]
    %v94 = vld [vmem:[#allocation5 + $0xa0] sm:$0xff]
    %v95 = vld [vmem:[#allocation5 + $0xa8] sm:$0xff]
    %v96 = vld [vmem:[#allocation5 + $0xb0] sm:$0xff]
    %v97 = vld [vmem:[#allocation5 + $0xb8] sm:$0xff]
    %v98 = vld [vmem:[#allocation5 + $0xc0] sm:$0xff]
    %v99 = vld [vmem:[#allocation5 + $0xc8] sm:$0xff]
    %v100 = vld [vmem:[#allocation5 + $0xd0] sm:$0xff]
    %v101 = vld [vmem:[#allocation5 + $0xd8] sm:$0xff]
    %v102 = vld [vmem:[#allocation5 + $0xe0] sm:$0xff]
    %v103 = vld [vmem:[#allocation5 + $0xe8] sm:$0xff]
    %v104 = vld [vmem:[#allocation5 + $0xf0] sm:$0xff]
    %v105 = vld [vmem:[#allocation5 + $0xf8] sm:$0xff]
    %v106 = vld [vmem:[#allocation5 + $0x100] sm:$0xff]
    %v107 = vld [vmem:[#allocation5 + $0x108] sm:$0xff]
    %v108 = vld [vmem:[#allocation5 + $0x110] sm:$0xff]
    %v109 = vld [vmem:[#allocation5 + $0x118] sm:$0xff]
    %v110 = vld [vmem:[#allocation5 + $0x120] sm:$0xff]
    %v111 = vld [vmem:[#allocation5 + $0x128] sm:$0xff]
    %v112 = vld [vmem:[#allocation5 + $0x130] sm:$0xff]
    %v113 = vld [vmem:[#allocation5 + $0x138] sm:$0xff]
    %v114 = vld [vmem:[#allocation5 + $0x140] sm:$0xff]
    %v115 = vld [vmem:[#allocation5 + $0x148] sm:$0xff]
    %v116 = vld [vmem:[#allocation5 + $0x150] sm:$0xff]
    %v117 = vld [vmem:[#allocation5 + $0x158] sm:$0xff]
    %v118 = vld [vmem:[#allocation5 + $0x160] sm:$0xff]
    %v119 = vld [vmem:[#allocation5 + $0x168] sm:$0xff]
    %v120 = vld [vmem:[#allocation5 + $0x170] sm:$0xff]
    %v121 = vld [vmem:[#allocation5 + $0x178] sm:$0xff]
    %v122 = vld [vmem:[#allocation5 + $0x180] sm:$0xff]
    %v123 = vld [vmem:[#allocation5 + $0x188] sm:$0xff]
    %v124 = vld [vmem:[#allocation5 + $0x190] sm:$0xff]
    %v125 = vld [vmem:[#allocation5 + $0x198] sm:$0xff]
    %v126 = vld [vmem:[#allocation5 + $0x1a0] sm:$0xff]
    %v127 = vld [vmem:[#allocation5 + $0x1a8] sm:$0xff]
    %v128 = vld [vmem:[#allocation5 + $0x1b0] sm:$0xff]
    %v129 = vld [vmem:[#allocation5 + $0x1b8] sm:$0xff]
    %v130 = vld [vmem:[#allocation5 + $0x1c0] sm:$0xff]
    %v131 = vld [vmem:[#allocation5 + $0x1c8] sm:$0xff]
    %v132 = vld [vmem:[#allocation5 + $0x1d0] sm:$0xff]
    %v133 = vld [vmem:[#allocation5 + $0x1d8] sm:$0xff]
    %v134 = vld [vmem:[#allocation5 + $0x1e0] sm:$0xff]
    %v135 = vld [vmem:[#allocation5 + $0x1e8] sm:$0xff]
    %v136 = vld [vmem:[#allocation5 + $0x1f0] sm:$0xff]
    %v137 = vld [vmem:[#allocation5 + $0x1f8] sm:$0xff]
    %v138 = vld [vmem:[#allocation5 + $0x200] sm:$0xff]
    %v139 = vld [vmem:[#allocation5 + $0x208] sm:$0xff]
    %v140 = vld [vmem:[#allocation5 + $0x210] sm:$0xff]
    %v141 = vld [vmem:[#allocation5 + $0x218] sm:$0xff]
    %v142 = vld [vmem:[#allocation5 + $0x220] sm:$0xff]
    %v143 = vld [vmem:[#allocation5 + $0x228] sm:$0xff]
    %v144 = vld [vmem:[#allocation5 + $0x230] sm:$0xff]
    %v145 = vld [vmem:[#allocation5 + $0x238] sm:$0xff]
    %v146 = vld [vmem:[#allocation5 + $0x240] sm:$0xff]
    %v147 = vld [vmem:[#allocation5 + $0x248] sm:$0xff]
    %v148 = vld [vmem:[#allocation5 + $0x250] sm:$0xff]
    %v149 = vld [vmem:[#allocation5 + $0x258] sm:$0xff]
    %v150 = vld [vmem:[#allocation5 + $0x260] sm:$0xff]
    %v151 = vld [vmem:[#allocation5 + $0x268] sm:$0xff]
    %v152 = vld [vmem:[#allocation5 + $0x270] sm:$0xff]
    %v153 = vld [vmem:[#allocation5 + $0x278] sm:$0xff]
    %v154 = vld [vmem:[#allocation5 + $0x280] sm:$0xff]
    %v155 = vld [vmem:[#allocation5 + $0x288] sm:$0xff]
    %v156 = vld [vmem:[#allocation5 + $0x290] sm:$0xff]
    %v157 = vld [vmem:[#allocation5 + $0x298] sm:$0xff]
    %v158 = vld [vmem:[#allocation5 + $0x2a0] sm:$0xff]
    %v159 = vld [vmem:[#allocation5 + $0x2a8] sm:$0xff]
    %v160 = vld [vmem:[#allocation5 + $0x2b0] sm:$0xff]
    %v161 = vld [vmem:[#allocation5 + $0x2b8] sm:$0xff]
    %v162 = vld [vmem:[#allocation5 + $0x2c0] sm:$0xff]
    %v163 = vld [vmem:[#allocation5 + $0x2c8] sm:$0xff]
    %v164 = vld [vmem:[#allocation5 + $0x2d0] sm:$0xff]
    %v165 = vld [vmem:[#allocation5 + $0x2d8] sm:$0xff]
    %v166 = vld [vmem:[#allocation5 + $0x2e0] sm:$0xff]
    %v167 = vld [vmem:[#allocation5 + $0x2e8] sm:$0xff]
    %v168 = vld [vmem:[#allocation5 + $0x2f0] sm:$0xff]
    %v169 = vld [vmem:[#allocation5 + $0x2f8] sm:$0xff]
    %v170 = vld [vmem:[#allocation5 + $0x300] sm:$0xff]
    %v171 = vld [vmem:[#allocation5 + $0x308] sm:$0xff]
    %v172 = vld [vmem:[#allocation5 + $0x310] sm:$0xff]
    %v173 = vld [vmem:[#allocation5 + $0x318] sm:$0xff]
    %v174 = vld [vmem:[#allocation5 + $0x320] sm:$0xff]
    %v175 = vld [vmem:[#allocation5 + $0x328] sm:$0xff]
    %v176 = vld [vmem:[#allocation5 + $0x330] sm:$0xff]
    %v177 = vld [vmem:[#allocation5 + $0x338] sm:$0xff]
    %v178 = vld [vmem:[#allocation5 + $0x340] sm:$0xff]
    %v179 = vld [vmem:[#allocation5 + $0x348] sm:$0xff]
    %v180 = vld [vmem:[#allocation5 + $0x350] sm:$0xff]
    %v181 = vld [vmem:[#allocation5 + $0x358] sm:$0xff]
    %v182 = vld [vmem:[#allocation5 + $0x360] sm:$0xff]
    %v183 = vld [vmem:[#allocation5 + $0x368] sm:$0xff]
    %v184 = vld [vmem:[#allocation5 + $0x370] sm:$0xff]
    %v185 = vld [vmem:[#allocation5 + $0x378] sm:$0xff]
    %v186 = vld [vmem:[#allocation5 + $0x380] sm:$0xff]
    %v187 = vld [vmem:[#allocation5 + $0x388] sm:$0xff]
    %v188 = vld [vmem:[#allocation5 + $0x390] sm:$0xff]
    %v189 = vld [vmem:[#allocation5 + $0x398] sm:$0xff]
    %v190 = vld [vmem:[#allocation5 + $0x3a0] sm:$0xff]
    %v191 = vld [vmem:[#allocation5 + $0x3a8] sm:$0xff]
    %v192 = vld [vmem:[#allocation5 + $0x3b0] sm:$0xff]
    %v193 = vld [vmem:[#allocation5 + $0x3b8] sm:$0xff]
    %v194 = vld [vmem:[#allocation5 + $0x3c0] sm:$0xff]
    %v195 = vld [vmem:[#allocation5 + $0x3c8] sm:$0xff]
    %v196 = vld [vmem:[#allocation5 + $0x3d0] sm:$0xff]
    %v197 = vld [vmem:[#allocation5 + $0x3d8] sm:$0xff]
    %v198 = vld [vmem:[#allocation5 + $0x3e0] sm:$0xff]
    %v199 = vld [vmem:[#allocation5 + $0x3e8] sm:$0xff]
    %v200 = vld [vmem:[#allocation5 + $0x3f0] sm:$0xff]
    %v201 = vld [vmem:[#allocation5 + $0x3f8] sm:$0xff]
    %v202 = vld [vmem:[%s2] sm:$0x1]
    %v204 = vperm.slane %v202, 0
    %206 = vmatpush.xpose.msra.mxu0 %v194
    %207 = vmatpush.xpose.msra.mxu0 %v186
    %208 = vmatpush.xpose.msra.mxu0 %v178
    %209 = vmatpush.xpose.msra.mxu0 %v170
    %210 = vmatpush.xpose.msra.mxu0 %v162
    %211 = vmatpush.xpose.msra.mxu0 %v154
    %212 = vmatpush.xpose.msra.mxu0 %v146
    %213 = vmatpush.xpose.msra.mxu0 %v138
    %214 = vmatpush.xpose.msra.mxu0 %v130
    %215 = vmatpush.xpose.msra.mxu0 %v122
    %216 = vmatpush.xpose.msra.mxu0 %v114
    %217 = vmatpush.xpose.msra.mxu0 %v106
    %218 = vmatpush.xpose.msra.mxu0 %v98
    %219 = vmatpush.xpose.msra.mxu0 %v90
    %220 = vmatpush.xpose.msra.mxu0 %v82
    %221 = vmatpush.xpose.msra.mxu0 %v74
    %222 = vmatmul.f32.gmra.mxu0 %v66
    %v223 = vpop.f32.mrf.mxu0
    %v224 = vadd.f32 %v204, %v223
    %225 = vdwg.mxu0
    %226 = vmatpush.xpose.msra.mxu0 %v195
    %227 = vmatpush.xpose.msra.mxu0 %v187
    %228 = vmatpush.xpose.msra.mxu0 %v179
    %229 = vmatpush.xpose.msra.mxu0 %v171
    %230 = vmatpush.xpose.msra.mxu0 %v163
    %231 = vmatpush.xpose.msra.mxu0 %v155
    %232 = vmatpush.xpose.msra.mxu0 %v147
    %233 = vmatpush.xpose.msra.mxu0 %v139
    %234 = vmatpush.xpose.msra.mxu0 %v131
    %235 = vmatpush.xpose.msra.mxu0 %v123
    %236 = vmatpush.xpose.msra.mxu0 %v115
    %237 = vmatpush.xpose.msra.mxu0 %v107
    %238 = vmatpush.xpose.msra.mxu0 %v99
    %239 = vmatpush.xpose.msra.mxu0 %v91
    %240 = vmatpush.xpose.msra.mxu0 %v83
    %241 = vmatpush.xpose.msra.mxu0 %v75
    %242 = vmatmul.f32.gmra.mxu0 %v67
    %v243 = vpop.f32.mrf.mxu0
    %v244 = vadd.f32 %v224, %v243
    %245 = vdwg.mxu0
    %246 = vmatpush.xpose.msra.mxu0 %v196
    %247 = vmatpush.xpose.msra.mxu0 %v188
    %248 = vmatpush.xpose.msra.mxu0 %v180
    %249 = vmatpush.xpose.msra.mxu0 %v172
    %250 = vmatpush.xpose.msra.mxu0 %v164
    %251 = vmatpush.xpose.msra.mxu0 %v156
    %252 = vmatpush.xpose.msra.mxu0 %v148
    %253 = vmatpush.xpose.msra.mxu0 %v140
    %254 = vmatpush.xpose.msra.mxu0 %v132
    %255 = vmatpush.xpose.msra.mxu0 %v124
    %256 = vmatpush.xpose.msra.mxu0 %v116
    %257 = vmatpush.xpose.msra.mxu0 %v108
    %258 = vmatpush.xpose.msra.mxu0 %v100
    %259 = vmatpush.xpose.msra.mxu0 %v92
    %260 = vmatpush.xpose.msra.mxu0 %v84
    %261 = vmatpush.xpose.msra.mxu0 %v76
    %262 = vmatmul.f32.gmra.mxu0 %v68
    %v263 = vpop.f32.mrf.mxu0
    %v264 = vadd.f32 %v244, %v263
    %265 = vdwg.mxu0
    %266 = vmatpush.xpose.msra.mxu0 %v197
    %267 = vmatpush.xpose.msra.mxu0 %v189
    %268 = vmatpush.xpose.msra.mxu0 %v181
    %269 = vmatpush.xpose.msra.mxu0 %v173
    %270 = vmatpush.xpose.msra.mxu0 %v165
    %271 = vmatpush.xpose.msra.mxu0 %v157
    %272 = vmatpush.xpose.msra.mxu0 %v149
    %273 = vmatpush.xpose.msra.mxu0 %v141
    %274 = vmatpush.xpose.msra.mxu0 %v133
    %275 = vmatpush.xpose.msra.mxu0 %v125
    %276 = vmatpush.xpose.msra.mxu0 %v117
    %277 = vmatpush.xpose.msra.mxu0 %v109
    %278 = vmatpush.xpose.msra.mxu0 %v101
    %279 = vmatpush.xpose.msra.mxu0 %v93
    %280 = vmatpush.xpose.msra.mxu0 %v85
    %281 = vmatpush.xpose.msra.mxu0 %v77
    %282 = vmatmul.f32.gmra.mxu0 %v69
    %v283 = vpop.f32.mrf.mxu0
    %v284 = vadd.f32 %v264, %v283
    %285 = vdwg.mxu0
    %286 = vmatpush.xpose.msra.mxu0 %v198
    %287 = vmatpush.xpose.msra.mxu0 %v190
    %288 = vmatpush.xpose.msra.mxu0 %v182
    %289 = vmatpush.xpose.msra.mxu0 %v174
    %290 = vmatpush.xpose.msra.mxu0 %v166
    %291 = vmatpush.xpose.msra.mxu0 %v158
    %292 = vmatpush.xpose.msra.mxu0 %v150
    %293 = vmatpush.xpose.msra.mxu0 %v142
    %294 = vmatpush.xpose.msra.mxu0 %v134
    %295 = vmatpush.xpose.msra.mxu0 %v126
    %296 = vmatpush.xpose.msra.mxu0 %v118
    %297 = vmatpush.xpose.msra.mxu0 %v110
    %298 = vmatpush.xpose.msra.mxu0 %v102
    %299 = vmatpush.xpose.msra.mxu0 %v94
    %300 = vmatpush.xpose.msra.mxu0 %v86
    %301 = vmatpush.xpose.msra.mxu0 %v78
    %302 = vmatmul.f32.gmra.mxu0 %v70
    %v303 = vpop.f32.mrf.mxu0
    %v304 = vadd.f32 %v284, %v303
    %305 = vdwg.mxu0
    %306 = vmatpush.xpose.msra.mxu0 %v199
    %307 = vmatpush.xpose.msra.mxu0 %v191
    %308 = vmatpush.xpose.msra.mxu0 %v183
    %309 = vmatpush.xpose.msra.mxu0 %v175
    %310 = vmatpush.xpose.msra.mxu0 %v167
    %311 = vmatpush.xpose.msra.mxu0 %v159
    %312 = vmatpush.xpose.msra.mxu0 %v151
    %313 = vmatpush.xpose.msra.mxu0 %v143
    %314 = vmatpush.xpose.msra.mxu0 %v135
    %315 = vmatpush.xpose.msra.mxu0 %v127
    %316 = vmatpush.xpose.msra.mxu0 %v119
    %317 = vmatpush.xpose.msra.mxu0 %v111
    %318 = vmatpush.xpose.msra.mxu0 %v103
    %319 = vmatpush.xpose.msra.mxu0 %v95
    %320 = vmatpush.xpose.msra.mxu0 %v87
    %321 = vmatpush.xpose.msra.mxu0 %v79
    %322 = vmatmul.f32.gmra.mxu0 %v71
    %v323 = vpop.f32.mrf.mxu0
    %v324 = vadd.f32 %v304, %v323
    %325 = vdwg.mxu0
    %326 = vmatpush.xpose.msra.mxu0 %v200
    %327 = vmatpush.xpose.msra.mxu0 %v192
    %328 = vmatpush.xpose.msra.mxu0 %v184
    %329 = vmatpush.xpose.msra.mxu0 %v176
    %330 = vmatpush.xpose.msra.mxu0 %v168
    %331 = vmatpush.xpose.msra.mxu0 %v160
    %332 = vmatpush.xpose.msra.mxu0 %v152
    %333 = vmatpush.xpose.msra.mxu0 %v144
    %334 = vmatpush.xpose.msra.mxu0 %v136
    %335 = vmatpush.xpose.msra.mxu0 %v128
    %336 = vmatpush.xpose.msra.mxu0 %v120
    %337 = vmatpush.xpose.msra.mxu0 %v112
    %338 = vmatpush.xpose.msra.mxu0 %v104
    %339 = vmatpush.xpose.msra.mxu0 %v96
    %340 = vmatpush.xpose.msra.mxu0 %v88
    %341 = vmatpush.xpose.msra.mxu0 %v80
    %342 = vmatmul.f32.gmra.mxu0 %v72
    %v343 = vpop.f32.mrf.mxu0
    %v344 = vadd.f32 %v324, %v343
    %345 = vdwg.mxu0
    %346 = vmatpush.xpose.msra.mxu0 %v201
    %347 = vmatpush.xpose.msra.mxu0 %v193
    %348 = vmatpush.xpose.msra.mxu0 %v185
    %349 = vmatpush.xpose.msra.mxu0 %v177
    %350 = vmatpush.xpose.msra.mxu0 %v169
    %351 = vmatpush.xpose.msra.mxu0 %v161
    %352 = vmatpush.xpose.msra.mxu0 %v153
    %353 = vmatpush.xpose.msra.mxu0 %v145
    %354 = vmatpush.xpose.msra.mxu0 %v137
    %355 = vmatpush.xpose.msra.mxu0 %v129
    %356 = vmatpush.xpose.msra.mxu0 %v121
    %357 = vmatpush.xpose.msra.mxu0 %v113
    %358 = vmatpush.xpose.msra.mxu0 %v105
    %359 = vmatpush.xpose.msra.mxu0 %v97
    %360 = vmatpush.xpose.msra.mxu0 %v89
    %361 = vmatpush.xpose.msra.mxu0 %v81
    %362 = vmatmul.f32.gmra.mxu0 %v73
    %v363 = vpop.f32.mrf.mxu0
    %v364 = vadd.f32 %v344, %v363
    %365 = vdwg.mxu0
    %v366 = vmax.f32 %v364, 0.0
    %v367 = vld [vmem:[#allocation7] sm:$0xff]
    %v368 = vld [vmem:[#allocation7 + $0x8] sm:$0xff]
    %v369 = vld [vmem:[#allocation7 + $0x10] sm:$0xff]
    %v370 = vld [vmem:[#allocation7 + $0x18] sm:$0xff]
    %v371 = vld [vmem:[#allocation7 + $0x20] sm:$0xff]
    %v372 = vld [vmem:[#allocation7 + $0x28] sm:$0xff]
    %v373 = vld [vmem:[#allocation7 + $0x30] sm:$0xff]
    %v374 = vld [vmem:[#allocation7 + $0x38] sm:$0xff]
    %v375 = vld [vmem:[#allocation7 + $0x40] sm:$0xff]
    %v376 = vld [vmem:[#allocation7 + $0x48] sm:$0xff]
    %v377 = vld [vmem:[#allocation7 + $0x50] sm:$0xff]
    %v378 = vld [vmem:[#allocation7 + $0x58] sm:$0xff]
    %v379 = vld [vmem:[#allocation7 + $0x60] sm:$0xff]
    %v380 = vld [vmem:[#allocation7 + $0x68] sm:$0xff]
    %v381 = vld [vmem:[#allocation7 + $0x70] sm:$0xff]
    %v382 = vld [vmem:[#allocation7 + $0x78] sm:$0xff]
    %v383 = vld [vmem:[%s4] sm:$0x1]
    %v385 = vperm.slane %v383, 0
    %387 = vmatpush.xpose.msra.mxu0 %v382
    %388 = vmatpush.xpose.msra.mxu0 %v381
    %389 = vmatpush.xpose.msra.mxu0 %v380
    %390 = vmatpush.xpose.msra.mxu0 %v379
    %391 = vmatpush.xpose.msra.mxu0 %v378
    %392 = vmatpush.xpose.msra.mxu0 %v377
    %393 = vmatpush.xpose.msra.mxu0 %v376
    %394 = vmatpush.xpose.msra.mxu0 %v375
    %395 = vmatpush.xpose.msra.mxu0 %v374
    %396 = vmatpush.xpose.msra.mxu0 %v373
    %397 = vmatpush.xpose.msra.mxu0 %v372
    %398 = vmatpush.xpose.msra.mxu0 %v371
    %399 = vmatpush.xpose.msra.mxu0 %v370
    %400 = vmatpush.xpose.msra.mxu0 %v369
    %401 = vmatpush.xpose.msra.mxu0 %v368
    %402 = vmatpush.xpose.msra.mxu0 %v367
    %403 = vmatmul.f32.gmra.mxu0 %v366
    %v404 = vpop.f32.mrf.mxu0
    %v405 = vadd.f32 %v385, %v404
    %406 = vdwg.mxu0
    %407 = vst [vmem:[#allocation8] sm:$0xff] %v405
    // Predicated region
    $region34: #{tpu_custom_call.1} parent=1 // pred_check
      _
    $region35: #{tpu_custom_call.1} parent=1 // pred_check_branch
      %409 = sbr.rel (0) target = $region37
    $region36: #{tpu_custom_call.1} parent=1 // pred_region
      %411 = vsyncadd [#allocation4], 0
      %s413 = sshll.u32 [#allocation8], 4
      %s414 = int_to_ptr.vmem [resolvable:$true] %s413
      %s415 = sshll.u32 %s5, 4
      %s416 = int_to_ptr.hbm [resolvable:$true] %s415
      %418 = dma.vmem_to_hbm [thread:$0]  %s414, 128, %s416, [#allocation4]
    $region37: #{tpu_custom_call.1} parent=1 // pred_fallthru
      _
    // Predicated region
    $region38: #{tpu_custom_call.1} parent=1 // pred_check
      _
    $region39: #{tpu_custom_call.1} parent=1 // pred_check_branch
      %420 = sbr.rel (0) target = $region41
    $region40: #{tpu_custom_call.1} parent=1 // pred_region
      %422 = dma.done [#allocation4], 128
    $region41: #{tpu_custom_call.1} parent=1 // pred_fallthru
      _
    %423 = vsyncpa [#allocation3], 1
    %424 = vsyncpa [#allocation6], 1
    %425 = vsyncpa [#allocation4], 1

</llo_original>
